<compile_context>
chip_gen: v7x
topology: tpu7x:2x2x1
jax: 0.10.0
libtpu: 0.0.40
codegen_flags: <defaults>
</compile_context>

<pallas_src>
import functools

import jax
import jax.numpy as jnp
from jax import lax
from jax.experimental import pallas as pl
from jax.experimental.pallas import tpu as pltpu


def _round_up(x: int, m: int) -> int:
    return ((x + m - 1) // m) * m


def _cdiv(a: int, b: int) -> int:
    return (a + b - 1) // b


@functools.cache
def _roll_is_numpy_convention() -> bool:
    """pltpu.roll is specified to match jnp.roll (element i moves to i+shift).

    Probe it once on-device (one tiny (8,128) kernel) so the tap construction
    below stays correct even if the rotate convention differs across backends.
    """

    def probe(x_ref, o_ref):
        o_ref[...] = pltpu.roll(x_ref[...], shift=1, axis=1)

    x = lax.broadcasted_iota(jnp.float32, (8, 128), 1)
    y = pl.pallas_call(
        probe, out_shape=jax.ShapeDtypeStruct((8, 128), jnp.float32)
    )(x)
    return bool(y[0, 0] == 127.0)


def _make_corr2d_kernel(kh, kw, tile_h, tile_w, halo_h, halo_w, roll_np):
    """Kernel for one lane-dense output tile.

    Ref order: main x tile, [right halo], [bottom halo], [corner halo],
    weight (SMEM), bias (SMEM), output tile, f32 VMEM accumulator.
    """
    h_halo = kh > 1
    w_halo = kw > 1
    ext_w = tile_w + (halo_w if w_halo else 0)

    def kernel(*refs):
        it = iter(refs)
        # Load each input view exactly once; cast to f32 right after the load
        # (keeps tap math in f32 -> also correct/fast on v5e with bf16 I/O).
        x = next(it)[...].astype(jnp.float32)                 # (tile_h, tile_w)
        if w_halo:
            xr = next(it)[...].astype(jnp.float32)            # (tile_h, halo_w)
            top = jnp.concatenate([x, xr], axis=1)            # (tile_h, ext_w)
        else:
            top = x
        if h_halo:
            xb = next(it)[...].astype(jnp.float32)            # (halo_h, tile_w)
            if w_halo:
                xc = next(it)[...].astype(jnp.float32)        # (halo_h, halo_w)
                bot = jnp.concatenate([xb, xc], axis=1)
            else:
                bot = xb
            ext = jnp.concatenate([top, bot], axis=0)         # (tile_h+halo_h, ext_w)
        else:
            ext = top
        w_ref = next(it)       # (kh, kw) f32, SMEM
        b_ref = next(it)       # (1,)     f32, SMEM
        o_ref = next(it)       # (tile_h, tile_w) output tile
        acc_ref = next(it)     # (tile_h, tile_w) f32 VMEM accumulator

        acc_ref[...] = jnp.zeros((tile_h, tile_w), jnp.float32)
        for dj in range(kw):
            if dj == 0:
                shifted = ext
            else:
                # Lane shift on the XLU: lane q of `shifted` holds ext[:, q+dj].
                shift = (ext_w - dj) if roll_np else dj
                shifted = pltpu.roll(ext, shift=shift, axis=1)
            for di in range(kh):
                tap = shifted[di:di + tile_h, :tile_w]        # lane-aligned slice
                acc_ref[...] += tap * w_ref[di, dj]
        o_ref[...] = (acc_ref[...] + b_ref[0]).astype(o_ref.dtype)

    return kernel


def conv2d_pallas(x, weight, bias, *, tile_h=256, tile_w=1024):
    """Forward of the PyTorch Conv2D module: corr2d(x, weight) + bias.

    x:      (H, W)  float32 or bfloat16
    weight: (kh, kw)
    bias:   (1,) or scalar
    returns (H - kh + 1, W - kw + 1), dtype of x
    """
    H, W = x.shape
    kh, kw = weight.shape
    ho, wo = H - kh + 1, W - kw + 1
    assert ho >= 1 and wo >= 1, "kernel must not be larger than the input"

    h_halo, w_halo = kh > 1, kw > 1

    # Sublane granularity depends on packing (f32: 8, bf16: 16, int8/fp8: 32).
    sub = max(8, 32 // jnp.dtype(x.dtype).itemsize)
    halo_h = max(sub, _round_up(kh - 1, sub))
    halo_w = max(128, _round_up(kw - 1, 128))

    # Lane-dense, sublane-aligned tiles, clamped to the (padded) problem size.
    tile_h = _round_up(min(tile_h, _round_up(ho, halo_h)), halo_h)
    tile_w = _round_up(min(tile_w, _round_up(wo, halo_w)), halo_w)
    nh, nw = _cdiv(ho, tile_h), _cdiv(wo, tile_w)

    # Zero-pad so every main tile and halo strip is fully in bounds; padded
    # output rows/cols are sliced off below, so padding never leaks.
    # TODO(synk): for very large images fold this pad into masked edge tiles to
    # avoid the extra HBM copy of x.
    Hp = nh * tile_h + (halo_h if h_halo else 0)
    Wp = nw * tile_w + (halo_w if w_halo else 0)
    x_pad = x if (Hp, Wp) == (H, W) else jnp.pad(x, ((0, Hp - H), (0, Wp - W)))

    w32 = weight.astype(jnp.float32).reshape(kh, kw)
    b32 = jnp.asarray(bias, jnp.float32).reshape(1)

    hb = tile_h // halo_h     # tile height in units of halo_h rows
    wb = tile_w // halo_w     # tile width  in units of halo_w cols

    # If DMA is still exposed at small tiles, pipeline_mode=pl.Buffered(3) on
    # the main x spec is the next knob (costs one extra input tile of VMEM).
    in_specs = [pl.BlockSpec((tile_h, tile_w), lambda i, j: (i, j))]
    operands = [x_pad]
    if w_halo:      # first halo_w columns to the right of the tile
        in_specs.append(
            pl.BlockSpec((tile_h, halo_w), lambda i, j: (i, (j + 1) * wb)))
        operands.append(x_pad)
    if h_halo:      # first halo_h rows below the tile
        in_specs.append(
            pl.BlockSpec((halo_h, tile_w), lambda i, j: ((i + 1) * hb, j)))
        operands.append(x_pad)
        if w_halo:  # bottom-right corner
            in_specs.append(
                pl.BlockSpec((halo_h, halo_w),
                             lambda i, j: ((i + 1) * hb, (j + 1) * wb)))
            operands.append(x_pad)
    in_specs += [
        pl.BlockSpec(memory_space=pltpu.MemorySpace.SMEM),    # weight scalars
        pl.BlockSpec(memory_space=pltpu.MemorySpace.SMEM),    # bias scalar
    ]
    operands += [w32, b32]

    kernel = _make_corr2d_kernel(kh, kw, tile_h, tile_w, halo_h, halo_w,
                                 _roll_is_numpy_convention())

    out_pad = pl.pallas_call(
        kernel,
        out_shape=jax.ShapeDtypeStruct((nh * tile_h, nw * tile_w), x.dtype),
        grid=(nh, nw),
        in_specs=in_specs,
        out_specs=pl.BlockSpec((tile_h, tile_w), lambda i, j: (i, j)),
        scratch_shapes=[pltpu.VMEM((tile_h, tile_w), jnp.float32)],
        compiler_params=pltpu.CompilerParams(
            # Output tiles are independent -> shard across v7x's 2 TensorCores.
            dimension_semantics=("parallel", "parallel"),
            # Explicit budget: ~6 MiB used at the default tile size; safe on
            # v5e/v6e (128 MiB VMEM) and v7x (64 MiB physical).
            vmem_limit_bytes=32 * 1024 * 1024,
        ),
    )(*operands)

    return out_pad[:ho, :wo]


def corr2d_reference(x, k):
    """Pure-JAX reference of the PyTorch corr2d (f32 accumulation)."""
    kh, kw = k.shape
    ho, wo = x.shape[0] - kh + 1, x.shape[1] - kw + 1
    out = jnp.zeros((ho, wo), jnp.float32)
    for di in range(kh):
        for dj in range(kw):
            out = out + x[di:di + ho, dj:dj + wo].astype(jnp.float32) * k[di, dj]
    return out


if __name__ == "__main__":
    key = jax.random.PRNGKey(0)
    k_x, k_w, k_x2, k_w2 = jax.random.split(key, 4)

    # Case 1: the module's own usage -- X is 6x8, kernel_size=(1, 2),
    # weight ~ U[0,1) (nn.Parameter(torch.rand(...))), bias = zeros(1).
    H, W = 6, 8
    kernel_size = (1, 2)
    x = jax.random.normal(k_x, (H, W), dtype=jnp.float32)
    weight = jax.random.uniform(k_w, kernel_size, dtype=jnp.float32)
    bias = jnp.zeros((1,), dtype=jnp.float32)

    y = conv2d_pallas(x, weight, bias)
    jax.block_until_ready(y)
    y_ref = corr2d_reference(x, weight) + bias[0]
    assert y.shape == (H - kernel_size[0] + 1, W - kernel_size[1] + 1)
    assert jnp.allclose(y, y_ref, atol=1e-5, rtol=1e-5)

    # Case 2: multi-tile grid + halos in both directions (kh>1, kw>1), f32.
    H2, W2, ks2 = 72, 300, (3, 5)
    x2 = jax.random.normal(k_x2, (H2, W2), dtype=jnp.float32)
    w2 = jax.random.uniform(k_w2, ks2, dtype=jnp.float32)
    b2 = jnp.full((1,), 0.25, dtype=jnp.float32)
    y2 = conv2d_pallas(x2, w2, b2, tile_h=32, tile_w=128)
    jax.block_until_ready(y2)
    y2_ref = corr2d_reference(x2, w2) + b2[0]
    assert y2.shape == (H2 - ks2[0] + 1, W2 - ks2[1] + 1)
    assert jnp.allclose(y2, y2_ref, atol=1e-4, rtol=1e-4)

    # Case 3: bf16 I/O with f32 accumulation (HBM-bandwidth lever on v6e/v7x).
    x2_bf16 = x2.astype(jnp.bfloat16)
    y3 = conv2d_pallas(x2_bf16, w2, b2, tile_h=32, tile_w=128)
    jax.block_until_ready(y3)
    y3_ref = corr2d_reference(x2_bf16.astype(jnp.float32), w2) + b2[0]
    assert jnp.allclose(y3.astype(jnp.float32), y3_ref, atol=5e-2, rtol=5e-2)

    print("KERNEL_OK")
</pallas_src>

<mosaic_0001>
module attributes {stable_mosaic.version = 11 : i64} {
  func.func @probe(%arg0: memref<8x128xf32, #tpu.memory_space<vmem>>, %arg1: memref<8x128xf32, #tpu.memory_space<vmem>>) attributes {dimension_semantics = [], scalar_prefetch = 0 : i64, scratch_operands = 0 : i64, tpu.core_type = #tpu.core_type<tc>} {
    %c0 = arith.constant 0 : index
    %c0_0 = arith.constant 0 : index
    %0 = vector.load %arg0[%c0, %c0_0] : memref<8x128xf32, #tpu.memory_space<vmem>>, vector<8x128xf32>
    %c1_i32 = arith.constant 1 : i32
    %1 = tpu.dynamic_rotate %0 by %c1_i32 dim 1 : vector<8x128xf32>, i32 -> vector<8x128xf32>
    %c0_1 = arith.constant 0 : index
    %c0_2 = arith.constant 0 : index
    %2 = vector.load %arg1[%c0_1, %c0_2] : memref<8x128xf32, #tpu.memory_space<vmem>>, vector<8x128xf32>
    tpu.vector_store %arg1[%c0_1, %c0_2], %1 {strides = array<i32>} : memref<8x128xf32, #tpu.memory_space<vmem>>, vector<8x128xf32>,
    return
  }
}

</mosaic_0001>

<llo_original>
// kernel: tpu_custom_call.1
$region0: #{tpu_custom_call.1}
  #allocation0 [shape = 'u32[]', space=smem, size = 0x4, offset = 0x4, fixed_abs, tag = 'smem constant byte address 0x4 - core index']
  #allocation1 [shape = 'u32[144,128]{1,0:T(1,128)}', space=vmem, size = 0x12000, scoped, tag = 'internal scratch']
  %s0 = inlined_call_operand.hbm [shape: f32[8,128], index: 0, kind: input, shape index: {}]
  %s1 = inlined_call_operand.hbm [shape: f32[8,128], index: 1, kind: output, shape index: {}]
  %s2 = sld [smem:[#allocation0]]
  $region18: #{tpu_custom_call.1} parent=0
    _
  %s4 = ssub.s32 1, %s2
  %s5 = scalar_select 0, %s4, %s2
  $region1: #{tpu_custom_call.1} parent=0
    #allocation2 [shape = 'u8[4096]{0}', space=vmem, size = 0x1000, scoped, tag = 'input window, operand 0, single buffered']
    #allocation3 [shape = 's32[1]{0}', space=sflag, size = 0x4, scoped, tag = 'scoped memory for tpu_custom_call.1']
    #allocation4 [shape = 's32[1]{0}', space=sflag, size = 0x4, scoped, tag = 'scoped memory for tpu_custom_call.1']
    #allocation5 [shape = 'u8[4096]{0}', space=vmem, size = 0x1000, scoped, tag = 'output window, operand 0, single buffered']
    %6 = vsyncpa [#allocation3], 0
    %7 = vsyncpa [#allocation4], 0
    // Predicated region
    $region2: #{tpu_custom_call.1} parent=1 // pred_check
      _
    $region3: #{tpu_custom_call.1} parent=1 // pred_check_branch
      %9 = sbr.rel (0) target = $region5
    $region4: #{tpu_custom_call.1} parent=1 // pred_region
      %s11 = ssub.s32 128, 128
      %12 = vsyncadd [#allocation3], %s11
      %s14 = sshll.u32 [#allocation2], 4
      %s15 = int_to_ptr.vmem [resolvable:$true] %s14
      %17 = dma.hbm_to_vmem [thread:$0]  %s0, 128, %s15, [#allocation3]
    $region5: #{tpu_custom_call.1} parent=1 // pred_fallthru
      _
    // Predicated region
    $region6: #{tpu_custom_call.1} parent=1 // pred_check
      _
    $region7: #{tpu_custom_call.1} parent=1 // pred_check_branch
      %19 = sbr.rel (0) target = $region9
    $region8: #{tpu_custom_call.1} parent=1 // pred_region
      %20 = dma.done [#allocation3], 128
    $region9: #{tpu_custom_call.1} parent=1 // pred_fallthru
      _
    %v21 = vld [vmem:[#allocation2] sm:$0xff]
    %22 = vrot.lane.b32.xlu0 %v21, 1
    %v23 = vpop.permute.xlu0 %22
    %24 = vst [vmem:[#allocation5] sm:$0xff] %v23
    // Predicated region
    $region10: #{tpu_custom_call.1} parent=1 // pred_check
      _
    $region11: #{tpu_custom_call.1} parent=1 // pred_check_branch
      %26 = sbr.rel (0) target = $region13
    $region12: #{tpu_custom_call.1} parent=1 // pred_region
      %s28 = ssub.s32 128, 128
      %29 = vsyncadd [#allocation4], %s28
      %s31 = sshll.u32 [#allocation5], 4
      %s32 = int_to_ptr.vmem [resolvable:$true] %s31
      %34 = dma.vmem_to_hbm [thread:$0]  %s32, 128, %s1, [#allocation4]
    $region13: #{tpu_custom_call.1} parent=1 // pred_fallthru
      _
    // Predicated region
    $region14: #{tpu_custom_call.1} parent=1 // pred_check
      _
    $region15: #{tpu_custom_call.1} parent=1 // pred_check_branch
      %36 = sbr.rel (0) target = $region17
    $region16: #{tpu_custom_call.1} parent=1 // pred_region
      %37 = dma.done [#allocation4], 128
    $region17: #{tpu_custom_call.1} parent=1 // pred_fallthru
      _
    %38 = vsyncpa [#allocation3], 1
    %39 = vsyncpa [#allocation4], 1

</llo_original>
